<compile_context>
chip_gen: v6e
topology: v6e:2x2x1
jax: 0.10.0
libtpu: 0.0.40
codegen_flags: <defaults>
</compile_context>

<pallas_src>
import functools

import jax
import jax.numpy as jnp
from jax import lax
from jax.experimental import pallas as pl
from jax.experimental.pallas import tpu as pltpu

TimeStep = 4
Vth = 0.6
Vth2 = 1.0
Vth3 = 1.5
tau = 0.25


def _mlf_kernel(x_ref, o_ref):
    # x_ref / o_ref: (TimeStep, tile_r, 128) float32 blocks in VMEM.
    T = x_ref.shape[0]
    TR = x_ref.shape[1]

    def process(r0, cs):
        rows = pl.ds(r0, cs)
        # t = 0: initial potentials are zero -> no spike -> u = u2 = u3 = x0.
        x0 = x_ref[0, rows, :]
        u = u2 = u3 = x0
        s1 = u > Vth
        s2 = u2 > Vth2
        s3 = u3 > Vth3
        o_ref[0, rows, :] = (
            s1.astype(jnp.float32)
            + s2.astype(jnp.float32)
            + s3.astype(jnp.float32)
        )
        # t = 1..T-1: soft reset gated by the previous step's spikes (compares
        # reused); u/u2/u3 stay resident in vregs across timesteps.
        for t in range(1, T):
            xt = x_ref[t, rows, :]
            u = jnp.where(s1, xt, tau * u + xt)
            u2 = jnp.where(s2, xt, tau * u2 + xt)
            u3 = jnp.where(s3, xt, tau * u3 + xt)
            s1 = u > Vth
            s2 = u2 > Vth2
            s3 = u3 > Vth3
            o_ref[t, rows, :] = (
                s1.astype(jnp.float32)
                + s2.astype(jnp.float32)
                + s3.astype(jnp.float32)
            )

    # 32 rows x 128 lanes = 4 vregs per live array; fori_loop (not a Python
    # unroll) bounds live ranges per chunk, small unroll keeps LLO visibility.
    CH = 32
    nfull = TR // CH
    rem = TR % CH

    if nfull > 0:
        def body(c, carry):
            process(pl.multiple_of(c * CH, CH), CH)
            return carry

        lax.fori_loop(0, nfull, body, 0, unroll=2)
    if rem:
        process(nfull * CH, rem)


def _round_up(v, m):
    return ((v + m - 1) // m) * m


@functools.partial(jax.jit, static_argnames=("tile_r",))
def mlf_forward(x, tile_r=2048):
    """x: (TimeStep*bs, C, H, W) -> float32 of the same shape."""
    assert x.shape[0] % TimeStep == 0
    orig_shape = x.shape
    if x.dtype != jnp.float32:
        x = x.astype(jnp.float32)
    M = x.size // TimeStep  # bs * C * H * W

    # Free (bitcast) reshape to (TimeStep, M).
    x2d = x.reshape(TimeStep, M)

    R = pl.cdiv(M, 128)
    M_pad = R * 128
    padded = M_pad != M
    if padded:
        # Fallback only for M not a multiple of 128 (never hit by VGG16
        # feature maps); keeps the lane-dense (R, 128) layout in the kernel.
        x2d = jnp.pad(x2d, ((0, 0), (0, M_pad - M)))
    x3d = x2d.reshape(TimeStep, R, 128)

    # Row-tile choice: big for DMA amortization, but clamped so the grid has
    # at least 2 blocks whenever possible (megacore sharding on v7x), and a
    # multiple of 8 sublanes unless it equals the full row extent.
    tr = min(tile_r, R)
    if R > 8:
        tr = min(tr, _round_up(pl.cdiv(R, 2), 8))
    if tr < R:
        tr = max(8, (tr // 8) * 8)
    grid = (pl.cdiv(R, tr),)

    out = pl.pallas_call(
        _mlf_kernel,
        out_shape=jax.ShapeDtypeStruct((TimeStep, R, 128), jnp.float32),
        grid=grid,
        in_specs=[pl.BlockSpec((TimeStep, tr, 128), lambda i: (0, i, 0))],
        out_specs=pl.BlockSpec((TimeStep, tr, 128), lambda i: (0, i, 0)),
        compiler_params=pltpu.CompilerParams(
            dimension_semantics=("parallel",),
            vmem_limit_bytes=32 << 20,
        ),
    )(x3d)

    if padded:
        return out.reshape(TimeStep, M_pad)[:, :M].reshape(orig_shape)
    return out.reshape(orig_shape)


def mlf_reference(x):
    """Pure-JAX reference matching the PyTorch forward exactly."""
    bs = x.shape[0] // TimeStep
    x = x.astype(jnp.float32)
    u = jnp.zeros((bs,) + x.shape[1:], jnp.float32)
    u2 = jnp.zeros_like(u)
    u3 = jnp.zeros_like(u)
    outs = []
    for t in range(TimeStep):
        xt = x[t * bs:(t + 1) * bs]
        u = tau * u * (1.0 - (u > Vth).astype(jnp.float32)) + xt
        u2 = tau * u2 * (1.0 - (u2 > Vth2).astype(jnp.float32)) + xt
        u3 = tau * u3 * (1.0 - (u3 > Vth3).astype(jnp.float32)) + xt
        outs.append(
            (u > Vth).astype(jnp.float32)
            + (u2 > Vth2).astype(jnp.float32)
            + (u3 > Vth3).astype(jnp.float32)
        )
    return jnp.concatenate(outs, axis=0)


if __name__ == "__main__":
    key = jax.random.PRNGKey(0)

    # Main test: bs=2, C=4, H=16, W=16 -> x shape (TimeStep*bs, C, H, W).
    # M = 2048 -> R = 16 -> tile clamp gives a 2-block grid (megacore path).
    bs, C, H, W = 2, 4, 16, 16
    x = jax.random.uniform(
        key, (TimeStep * bs, C, H, W), dtype=jnp.float32, minval=0.0, maxval=2.0
    )
    out = jax.block_until_ready(mlf_forward(x))
    ref = mlf_reference(x)
    assert out.shape == x.shape
    assert out.dtype == jnp.float32
    assert jnp.allclose(out, ref), "Pallas MLF output mismatch vs reference"

    # Extra check: odd shape exercising the ragged (M % 128 != 0) fallback
    # and the full-row-extent (tr == R < 8) block path.
    k2 = jax.random.PRNGKey(1)
    x_odd = jax.random.uniform(
        k2, (TimeStep * 3, 3, 7, 5), dtype=jnp.float32, minval=0.0, maxval=2.0
    )
    out_odd = jax.block_until_ready(mlf_forward(x_odd))
    assert jnp.allclose(out_odd, mlf_reference(x_odd)), "odd-shape mismatch"

    print("KERNEL_OK")
</pallas_src>

<mosaic_0001>
module attributes {stable_mosaic.version = 11 : i64} {
  func.func @_mlf_kernel(%arg0: i32, %arg1: memref<4x8x128xf32, #tpu.memory_space<vmem>>, %arg2: memref<4x8x128xf32, #tpu.memory_space<vmem>>) attributes {dimension_semantics = [#tpu.dimension_semantics<parallel>], iteration_bounds = array<i64: 2>, scalar_prefetch = 0 : i64, scratch_operands = 0 : i64, tpu.core_type = #tpu.core_type<tc>, window_params = [{transform_indices = @transform_0, window_bounds = array<i64: 4, 8, 128>}, {transform_indices = @transform_1, window_bounds = array<i64: 4, 8, 128>}]} {
    %c0 = arith.constant 0 : index
    %c0_0 = arith.constant 0 : index
    %c0_1 = arith.constant 0 : index
    %0 = vector.load %arg1[%c0, %c0_0, %c0_1] : memref<4x8x128xf32, #tpu.memory_space<vmem>>, vector<1x8x128xf32>
    %1 = vector.shape_cast %0 : vector<1x8x128xf32> to vector<8x128xf32>
    %cst = arith.constant 6.000000e-01 : f32
    %2 = vector.broadcast %cst : f32 to vector<8x128xf32>
    %3 = arith.cmpf ogt, %1, %2 : vector<8x128xf32>
    %cst_2 = arith.constant 1.000000e+00 : f32
    %4 = vector.broadcast %cst_2 : f32 to vector<8x128xf32>
    %5 = arith.cmpf ogt, %1, %4 : vector<8x128xf32>
    %cst_3 = arith.constant 1.500000e+00 : f32
    %6 = vector.broadcast %cst_3 : f32 to vector<8x128xf32>
    %7 = arith.cmpf ogt, %1, %6 : vector<8x128xf32>
    %8 = arith.extui %3 : vector<8x128xi1> to vector<8x128xi32>
    %9 = arith.sitofp %8 : vector<8x128xi32> to vector<8x128xf32>
    %10 = arith.extui %5 : vector<8x128xi1> to vector<8x128xi32>
    %11 = arith.sitofp %10 : vector<8x128xi32> to vector<8x128xf32>
    %12 = arith.addf %9, %11 : vector<8x128xf32>
    %13 = arith.extui %7 : vector<8x128xi1> to vector<8x128xi32>
    %14 = arith.sitofp %13 : vector<8x128xi32> to vector<8x128xf32>
    %15 = arith.addf %12, %14 : vector<8x128xf32>
    %c0_4 = arith.constant 0 : index
    %c0_5 = arith.constant 0 : index
    %c0_6 = arith.constant 0 : index
    %16 = vector.load %arg2[%c0_4, %c0_5, %c0_6] : memref<4x8x128xf32, #tpu.memory_space<vmem>>, vector<1x8x128xf32>
    %17 = vector.shape_cast %16 : vector<1x8x128xf32> to vector<8x128xf32>
    %18 = vector.shape_cast %15 : vector<8x128xf32> to vector<1x8x128xf32>
    tpu.vector_store %arg2[%c0_4, %c0_5, %c0_6], %18 {strides = array<i32>} : memref<4x8x128xf32, #tpu.memory_space<vmem>>, vector<1x8x128xf32>,
    %c1 = arith.constant 1 : index
    %c0_7 = arith.constant 0 : index
    %c0_8 = arith.constant 0 : index
    %19 = vector.load %arg1[%c1, %c0_7, %c0_8] : memref<4x8x128xf32, #tpu.memory_space<vmem>>, vector<1x8x128xf32>
    %20 = vector.shape_cast %19 : vector<1x8x128xf32> to vector<8x128xf32>
    %cst_9 = arith.constant 2.500000e-01 : f32
    %21 = vector.broadcast %cst_9 : f32 to vector<8x128xf32>
    %22 = arith.mulf %21, %1 : vector<8x128xf32>
    %23 = arith.addf %22, %20 : vector<8x128xf32>
    %24 = arith.select %3, %20, %23 : vector<8x128xi1>, vector<8x128xf32>
    %cst_10 = arith.constant 2.500000e-01 : f32
    %25 = vector.broadcast %cst_10 : f32 to vector<8x128xf32>
    %26 = arith.mulf %25, %1 : vector<8x128xf32>
    %27 = arith.addf %26, %20 : vector<8x128xf32>
    %28 = arith.select %5, %20, %27 : vector<8x128xi1>, vector<8x128xf32>
    %cst_11 = arith.constant 2.500000e-01 : f32
    %29 = vector.broadcast %cst_11 : f32 to vector<8x128xf32>
    %30 = arith.mulf %29, %1 : vector<8x128xf32>
    %31 = arith.addf %30, %20 : vector<8x128xf32>
    %32 = arith.select %7, %20, %31 : vector<8x128xi1>, vector<8x128xf32>
    %cst_12 = arith.constant 6.000000e-01 : f32
    %33 = vector.broadcast %cst_12 : f32 to vector<8x128xf32>
    %34 = arith.cmpf ogt, %24, %33 : vector<8x128xf32>
    %cst_13 = arith.constant 1.000000e+00 : f32
    %35 = vector.broadcast %cst_13 : f32 to vector<8x128xf32>
    %36 = arith.cmpf ogt, %28, %35 : vector<8x128xf32>
    %cst_14 = arith.constant 1.500000e+00 : f32
    %37 = vector.broadcast %cst_14 : f32 to vector<8x128xf32>
    %38 = arith.cmpf ogt, %32, %37 : vector<8x128xf32>
    %39 = arith.extui %34 : vector<8x128xi1> to vector<8x128xi32>
    %40 = arith.sitofp %39 : vector<8x128xi32> to vector<8x128xf32>
    %41 = arith.extui %36 : vector<8x128xi1> to vector<8x128xi32>
    %42 = arith.sitofp %41 : vector<8x128xi32> to vector<8x128xf32>
    %43 = arith.addf %40, %42 : vector<8x128xf32>
    %44 = arith.extui %38 : vector<8x128xi1> to vector<8x128xi32>
    %45 = arith.sitofp %44 : vector<8x128xi32> to vector<8x128xf32>
    %46 = arith.addf %43, %45 : vector<8x128xf32>
    %c1_15 = arith.constant 1 : index
    %c0_16 = arith.constant 0 : index
    %c0_17 = arith.constant 0 : index
    %47 = vector.load %arg2[%c1_15, %c0_16, %c0_17] : memref<4x8x128xf32, #tpu.memory_space<vmem>>, vector<1x8x128xf32>
    %48 = vector.shape_cast %47 : vector<1x8x128xf32> to vector<8x128xf32>
    %49 = vector.shape_cast %46 : vector<8x128xf32> to vector<1x8x128xf32>
    tpu.vector_store %arg2[%c1_15, %c0_16, %c0_17], %49 {strides = array<i32>} : memref<4x8x128xf32, #tpu.memory_space<vmem>>, vector<1x8x128xf32>,
    %c2 = arith.constant 2 : index
    %c0_18 = arith.constant 0 : index
    %c0_19 = arith.constant 0 : index
    %50 = vector.load %arg1[%c2, %c0_18, %c0_19] : memref<4x8x128xf32, #tpu.memory_space<vmem>>, vector<1x8x128xf32>
    %51 = vector.shape_cast %50 : vector<1x8x128xf32> to vector<8x128xf32>
    %cst_20 = arith.constant 2.500000e-01 : f32
    %52 = vector.broadcast %cst_20 : f32 to vector<8x128xf32>
    %53 = arith.mulf %52, %24 : vector<8x128xf32>
    %54 = arith.addf %53, %51 : vector<8x128xf32>
    %55 = arith.select %34, %51, %54 : vector<8x128xi1>, vector<8x128xf32>
    %cst_21 = arith.constant 2.500000e-01 : f32
    %56 = vector.broadcast %cst_21 : f32 to vector<8x128xf32>
    %57 = arith.mulf %56, %28 : vector<8x128xf32>
    %58 = arith.addf %57, %51 : vector<8x128xf32>
    %59 = arith.select %36, %51, %58 : vector<8x128xi1>, vector<8x128xf32>
    %cst_22 = arith.constant 2.500000e-01 : f32
    %60 = vector.broadcast %cst_22 : f32 to vector<8x128xf32>
    %61 = arith.mulf %60, %32 : vector<8x128xf32>
    %62 = arith.addf %61, %51 : vector<8x128xf32>
    %63 = arith.select %38, %51, %62 : vector<8x128xi1>, vector<8x128xf32>
    %cst_23 = arith.constant 6.000000e-01 : f32
    %64 = vector.broadcast %cst_23 : f32 to vector<8x128xf32>
    %65 = arith.cmpf ogt, %55, %64 : vector<8x128xf32>
    %cst_24 = arith.constant 1.000000e+00 : f32
    %66 = vector.broadcast %cst_24 : f32 to vector<8x128xf32>
    %67 = arith.cmpf ogt, %59, %66 : vector<8x128xf32>
    %cst_25 = arith.constant 1.500000e+00 : f32
    %68 = vector.broadcast %cst_25 : f32 to vector<8x128xf32>
    %69 = arith.cmpf ogt, %63, %68 : vector<8x128xf32>
    %70 = arith.extui %65 : vector<8x128xi1> to vector<8x128xi32>
    %71 = arith.sitofp %70 : vector<8x128xi32> to vector<8x128xf32>
    %72 = arith.extui %67 : vector<8x128xi1> to vector<8x128xi32>
    %73 = arith.sitofp %72 : vector<8x128xi32> to vector<8x128xf32>
    %74 = arith.addf %71, %73 : vector<8x128xf32>
    %75 = arith.extui %69 : vector<8x128xi1> to vector<8x128xi32>
    %76 = arith.sitofp %75 : vector<8x128xi32> to vector<8x128xf32>
    %77 = arith.addf %74, %76 : vector<8x128xf32>
    %c2_26 = arith.constant 2 : index
    %c0_27 = arith.constant 0 : index
    %c0_28 = arith.constant 0 : index
    %78 = vector.load %arg2[%c2_26, %c0_27, %c0_28] : memref<4x8x128xf32, #tpu.memory_space<vmem>>, vector<1x8x128xf32>
    %79 = vector.shape_cast %78 : vector<1x8x128xf32> to vector<8x128xf32>
    %80 = vector.shape_cast %77 : vector<8x128xf32> to vector<1x8x128xf32>
    tpu.vector_store %arg2[%c2_26, %c0_27, %c0_28], %80 {strides = array<i32>} : memref<4x8x128xf32, #tpu.memory_space<vmem>>, vector<1x8x128xf32>,
    %c3 = arith.constant 3 : index
    %c0_29 = arith.constant 0 : index
    %c0_30 = arith.constant 0 : index
    %81 = vector.load %arg1[%c3, %c0_29, %c0_30] : memref<4x8x128xf32, #tpu.memory_space<vmem>>, vector<1x8x128xf32>
    %82 = vector.shape_cast %81 : vector<1x8x128xf32> to vector<8x128xf32>
    %cst_31 = arith.constant 2.500000e-01 : f32
    %83 = vector.broadcast %cst_31 : f32 to vector<8x128xf32>
    %84 = arith.mulf %83, %55 : vector<8x128xf32>
    %85 = arith.addf %84, %82 : vector<8x128xf32>
    %86 = arith.select %65, %82, %85 : vector<8x128xi1>, vector<8x128xf32>
    %cst_32 = arith.constant 2.500000e-01 : f32
    %87 = vector.broadcast %cst_32 : f32 to vector<8x128xf32>
    %88 = arith.mulf %87, %59 : vector<8x128xf32>
    %89 = arith.addf %88, %82 : vector<8x128xf32>
    %90 = arith.select %67, %82, %89 : vector<8x128xi1>, vector<8x128xf32>
    %cst_33 = arith.constant 2.500000e-01 : f32
    %91 = vector.broadcast %cst_33 : f32 to vector<8x128xf32>
    %92 = arith.mulf %91, %63 : vector<8x128xf32>
    %93 = arith.addf %92, %82 : vector<8x128xf32>
    %94 = arith.select %69, %82, %93 : vector<8x128xi1>, vector<8x128xf32>
    %cst_34 = arith.constant 6.000000e-01 : f32
    %95 = vector.broadcast %cst_34 : f32 to vector<8x128xf32>
    %96 = arith.cmpf ogt, %86, %95 : vector<8x128xf32>
    %cst_35 = arith.constant 1.000000e+00 : f32
    %97 = vector.broadcast %cst_35 : f32 to vector<8x128xf32>
    %98 = arith.cmpf ogt, %90, %97 : vector<8x128xf32>
    %cst_36 = arith.constant 1.500000e+00 : f32
    %99 = vector.broadcast %cst_36 : f32 to vector<8x128xf32>
    %100 = arith.cmpf ogt, %94, %99 : vector<8x128xf32>
    %101 = arith.extui %96 : vector<8x128xi1> to vector<8x128xi32>
    %102 = arith.sitofp %101 : vector<8x128xi32> to vector<8x128xf32>
    %103 = arith.extui %98 : vector<8x128xi1> to vector<8x128xi32>
    %104 = arith.sitofp %103 : vector<8x128xi32> to vector<8x128xf32>
    %105 = arith.addf %102, %104 : vector<8x128xf32>
    %106 = arith.extui %100 : vector<8x128xi1> to vector<8x128xi32>
    %107 = arith.sitofp %106 : vector<8x128xi32> to vector<8x128xf32>
    %108 = arith.addf %105, %107 : vector<8x128xf32>
    %c3_37 = arith.constant 3 : index
    %c0_38 = arith.constant 0 : index
    %c0_39 = arith.constant 0 : index
    %109 = vector.load %arg2[%c3_37, %c0_38, %c0_39] : memref<4x8x128xf32, #tpu.memory_space<vmem>>, vector<1x8x128xf32>
    %110 = vector.shape_cast %109 : vector<1x8x128xf32> to vector<8x128xf32>
    %111 = vector.shape_cast %108 : vector<8x128xf32> to vector<1x8x128xf32>
    tpu.vector_store %arg2[%c3_37, %c0_38, %c0_39], %111 {strides = array<i32>} : memref<4x8x128xf32, #tpu.memory_space<vmem>>, vector<1x8x128xf32>,
    return
  }
  func.func @transform_0(%arg0: i32) -> (i32, i32, i32) {
    %c0_i32 = arith.constant 0 : i32
    %c0_i32_0 = arith.constant 0 : i32
    %c0_i32_1 = arith.constant 0 : i32
    return %c0_i32, %arg0, %c0_i32_0 : i32, i32, i32
  }
  func.func @transform_1(%arg0: i32) -> (i32, i32, i32) {
    %c0_i32 = arith.constant 0 : i32
    %c0_i32_0 = arith.constant 0 : i32
    %c0_i32_1 = arith.constant 0 : i32
    return %c0_i32, %arg0, %c0_i32_0 : i32, i32, i32
  }
}

</mosaic_0001>

<llo_original>
// kernel: mlf_forward.1
$region0: #{mlf_forward.1}
  #allocation0 [shape = 'u32[]', space=smem, size = 0x4, offset = 0x4, fixed_abs, tag = 'smem constant byte address 0x4 - core index']
  #allocation1 [shape = 'u32[144,128]{1,0:T(1,128)}', space=vmem, size = 0x12000, scoped, tag = 'internal scratch']
  %s0 = inlined_call_operand.vmem [shape: f32[4,16,128], index: 0, kind: input, shape index: {}]
  %s1 = inlined_call_operand.vmem [shape: f32[4,16,128], index: 1, kind: output, shape index: {}]
  %s2 = sld [smem:[#allocation0]]
  $region109: #{mlf_forward.1} parent=0
    _
  %s4 = ssub.s32 1, %s2
  %s5 = scalar_select 0, %s4, %s2
  $region1: #{mlf_forward.1} parent=0
    #allocation2 [shape = 'u8[32768]{0}', space=vmem, size = 0x8000, scoped, tag = 'input window, operand 0']
    #allocation3 [shape = 'u8[32768]{0}', space=vmem, size = 0x8000, scoped, tag = 'output window, operand 0']
    loop: start=0, step=1, limit=4
    $region2: #{mlf_forward.1} parent=1 // loop_pre_header
      _
    $region3: #{mlf_forward.1} parent=1 // loop_header
      %s7 = sphi 0, %s11
      %p8 = scmp.ge.s32.totalorder %s7, 4
      %s17 = sphi 0, %s19
      %s20 = sphi 0, %s17
      %s21 = sphi 0, %s20
      %s37 = sphi 0, %s21
      %s43 = sphi 0, %s45
      %s46 = sphi 0, %s43
      %s47 = sphi 0, %s46
      %s63 = sphi 0, %s47
    $region4: #{mlf_forward.1} parent=1 // loop_header_branch
      %10 = sbr.rel (%p8) target = $region8
    $region5: #{mlf_forward.1} parent=1 // loop_body
      %s12 = ssub.s32 %s7, 1
      %s13 = ssub.s32 %s7, 2
      %s14 = sadd.s32 %s7, 1
      %s15 = ssub.s32 %s7, %s14
      %p16 = scmp.eq.s32.totalorder %s15, 0
      %s18 = sadd.s32 %s17, 1
      %s19 = scalar_select %p16, %s17, %s18
      %p22 = pneg %p16
      %p23 = scmp.eq.s32.totalorder %s7, 1
      %p24 = por %p22, %p23
      %p25 = scmp.ne.s32.totalorder %s17, %s20
      %p26 = scmp.eq.s32.totalorder %s7, 0
      %p27 = por %p25, %p26
      %p28 = scmp.ne.s32.totalorder %s17, %s20
      %p29 = scmp.eq.s32.totalorder %s12, 1
      %p30 = por %p28, %p29
      %p31 = scmp.ne.s32.totalorder %s20, %s21
      %p32 = scmp.eq.s32.totalorder %s12, 0
      %p33 = por %p31, %p32
      %p34 = scmp.ne.s32.totalorder %s20, %s21
      %p35 = scmp.eq.s32.totalorder %s13, 1
      %p36 = por %p34, %p35
      %p38 = scmp.ne.s32.totalorder %s21, %s37
      %p39 = scmp.eq.s32.totalorder %s13, 0
      %p40 = por %p38, %p39
      %s41 = ssub.s32 %s7, %s14
      %p42 = scmp.eq.s32.totalorder %s41, 0
      %s44 = sadd.s32 %s43, 1
      %s45 = scalar_select %p42, %s43, %s44
      %p48 = pneg %p42
      %p49 = scmp.eq.s32.totalorder %s7, 1
      %p50 = por %p48, %p49
      %p51 = scmp.ne.s32.totalorder %s43, %s46
      %p52 = scmp.eq.s32.totalorder %s7, 0
      %p53 = por %p51, %p52
      %p54 = scmp.ne.s32.totalorder %s43, %s46
      %p55 = scmp.eq.s32.totalorder %s12, 1
      %p56 = por %p54, %p55
      %p57 = scmp.ne.s32.totalorder %s46, %s47
      %p58 = scmp.eq.s32.totalorder %s12, 0
      %p59 = por %p57, %p58
      %p60 = scmp.ne.s32.totalorder %s46, %s47
      %p61 = scmp.eq.s32.totalorder %s13, 1
      %p62 = por %p60, %p61
      %p64 = scmp.ne.s32.totalorder %s47, %s63
      %p65 = scmp.eq.s32.totalorder %s13, 0
      %p66 = por %p64, %p65
      %p67 = scmp.le.s32.totalorder 1, %s7
      %p68 = scmp.lt.s32.totalorder %s7, 3
      %p69 = pnand %p67, %p68
      %p70 = pneg %p69
      // Predicated region
      $region9: #{mlf_forward.1} parent=5 // pred_check
        _
      $region10: #{mlf_forward.1} parent=5 // pred_check_branch
        %72 = sbr.rel (%p69) target = $region12
      $region11: #{mlf_forward.1} parent=5 // pred_region
        %s73 = ssub.s32 %s7, 1
      $region12: #{mlf_forward.1} parent=5 // pred_fallthru
        _
      %p74 = scmp.lt.s32.totalorder %s7, 2
      // Predicated region
      $region13: #{mlf_forward.1} parent=5 // pred_check
        %p75 = pneg %p74
      $region14: #{mlf_forward.1} parent=5 // pred_check_branch
        %77 = sbr.rel (%p75) target = $region16
      $region15: #{mlf_forward.1} parent=5 // pred_region
        // Predicated region
        $region17: #{mlf_forward.1} parent=15 // pred_check
          %p78 = pneg %p27
        $region18: #{mlf_forward.1} parent=15 // pred_check_branch
          %80 = sbr.rel (%p78) target = $region20
        $region19: #{mlf_forward.1} parent=15 // pred_region
          %s81 = sand.u32 %s17, 1
          %s82 = sand.u32 %s17, 1
          %s83 = smul.addr %s82, 32
          %s84 = scalar_lea.vmem [#allocation2], %s83
          %s85 = smul.addr %s7, 8
          %s86 = scalar_lea.vmem %s0, %s85
          // Predicated region
          $region21: #{mlf_forward.1} parent=19 // pred_check
            _
          $region22: #{mlf_forward.1} parent=19 // pred_check_branch
            %88 = sbr.rel (0) target = $region24
          $region23: #{mlf_forward.1} parent=19 // pred_region
            // Predicated region
            $region25: #{mlf_forward.1} parent=23 // pred_check
              _
            $region26: #{mlf_forward.1} parent=23 // pred_check_branch
              %90 = sbr.rel (0) target = $region28
            $region27: #{mlf_forward.1} parent=23 // pred_region
              // Predicated region
              $region40: #{mlf_forward.1} parent=27 // pred_check
                _
              $region41: #{mlf_forward.1} parent=27 // pred_check_branch
                %112 = sbr.rel (0) target = $region43
              $region42: #{mlf_forward.1} parent=27 // pred_region
                loop: start=0, step=1, limit=1
                $region44: #{mlf_forward.1} parent=42 // loop_pre_header
                  _
                $region45: #{mlf_forward.1} parent=42 // loop_header
                  %s114 = sphi 0, %s118
                  %p115 = scmp.ge.s32.totalorder %s114, 1
                  %s119 = sphi %s86, %s86
                  %s120 = sphi %s84, %s84
                $region46: #{mlf_forward.1} parent=42 // loop_header_branch
                  %117 = sbr.rel (%p115) target = $region50
                $region47: #{mlf_forward.1} parent=42 // loop_body
                  %v121 = vld [vmem:[%s119] sm:$0xff]
                  %122 = vst [vmem:[%s120] sm:$0xff] %v121
                  %v123 = vld [vmem:[%s119 + $0x10] sm:$0xff]
                  %124 = vst [vmem:[%s120 + $0x8] sm:$0xff] %v123
                  %v125 = vld [vmem:[%s119 + $0x20] sm:$0xff]
                  %126 = vst [vmem:[%s120 + $0x10] sm:$0xff] %v125
                  %v127 = vld [vmem:[%s119 + $0x30] sm:$0xff]
                  %128 = vst [vmem:[%s120 + $0x18] sm:$0xff] %v127
                $region48: #{mlf_forward.1} parent=42 // loop_footer
                  %s118 = sadd.s32 1, %s114
                $region49: #{mlf_forward.1} parent=42 // loop_footer_branch
                  %113 = sbr.rel target = $region45
                $region50: #{mlf_forward.1} parent=42 // loop_exit
                  _
              $region43: #{mlf_forward.1} parent=27 // pred_fallthru
                _
              // Predicated region
              $region51: #{mlf_forward.1} parent=27 // pred_check
                _
              $region52: #{mlf_forward.1} parent=27 // pred_check_branch
                %130 = sbr.rel target = $region54
              $region53: #{mlf_forward.1} parent=27 // pred_region
                _
              $region54: #{mlf_forward.1} parent=27 // pred_fallthru
                _
            $region28: #{mlf_forward.1} parent=23 // pred_fallthru
              _
            // Predicated region
            $region29: #{mlf_forward.1} parent=23 // pred_check
              _
            $region30: #{mlf_forward.1} parent=23 // pred_check_branch
              %92 = sbr.rel target = $region32
            $region31: #{mlf_forward.1} parent=23 // pred_region
              %s94 = ssub.s32 256, 1
              loop: start=0, step=1, limit=1
              $region33: #{mlf_forward.1} parent=31 // loop_pre_header
                _
              $region34: #{mlf_forward.1} parent=31 // loop_header
                %s96 = sphi 0, %s100
                %p97 = scmp.ge.s32.totalorder %s96, 1
                %s101 = sphi %s86, %s86
                %s102 = sphi %s84, %s84
              $region35: #{mlf_forward.1} parent=31 // loop_header_branch
                %99 = sbr.rel (%p97) target = $region39
              $region36: #{mlf_forward.1} parent=31 // loop_body
                %v103 = vld [vmem:[%s101] sm:%s94]
                %104 = vst [vmem:[%s102] sm:%s94] %v103
                %v105 = vld [vmem:[%s101 + $0x10] sm:%s94]
                %106 = vst [vmem:[%s102 + $0x8] sm:%s94] %v105
                %v107 = vld [vmem:[%s101 + $0x20] sm:%s94]
                %108 = vst [vmem:[%s102 + $0x10] sm:%s94] %v107
                %v109 = vld [vmem:[%s101 + $0x30] sm:%s94]
                %110 = vst [vmem:[%s102 + $0x18] sm:%s94] %v109
              $region37: #{mlf_forward.1} parent=31 // loop_footer
                %s100 = sadd.s32 1, %s96
              $region38: #{mlf_forward.1} parent=31 // loop_footer_branch
                %95 = sbr.rel target = $region34
              $region39: #{mlf_forward.1} parent=31 // loop_exit
                _
            $region32: #{mlf_forward.1} parent=23 // pred_fallthru
              _
          $region24: #{mlf_forward.1} parent=19 // pred_fallthru
            _
          %131 = vnop
        $region20: #{mlf_forward.1} parent=15 // pred_fallthru
          _
      $region16: #{mlf_forward.1} parent=5 // pred_fallthru
        _
      %p132 = scmp.le.s32.totalorder 1, %s7
      %p133 = scmp.lt.s32.totalorder %s7, 3
      %p134 = pnand %p132, %p133
      %p135 = pneg %p134
      // Predicated region
      $region55: #{mlf_forward.1} parent=5 // pred_check
        _
      $region56: #{mlf_forward.1} parent=5 // pred_check_branch
        %137 = sbr.rel (%p134) target = $region58
      $region57: #{mlf_forward.1} parent=5 // pred_region
        %s138 = ssub.s32 %s7, 1
        %s139 = sand.u32 %s20, 1
        %s140 = sand.u32 %s20, 1
        %s141 = smul.addr %s140, 32
        %s142 = scalar_lea.vmem [#allocation2], %s141
        // Predicated region
        $region59: #{mlf_forward.1} parent=57 // pred_check
          %p143 = pneg %p33
        $region60: #{mlf_forward.1} parent=57 // pred_check_branch
          %145 = sbr.rel (%p143) target = $region62
        $region61: #{mlf_forward.1} parent=57 // pred_region
          _
        $region62: #{mlf_forward.1} parent=57 // pred_fallthru
          _
        %s146 = sand.u32 %s20, 1
        %s147 = sand.u32 %s20, 1
        %s148 = smul.addr %s147, 32
        %s149 = scalar_lea.vmem [#allocation2], %s148
        %p150 = pneg %p33
        %p151 = pneg %p30
        %p152 = pneg %p59
        %p153 = pneg %p56
        %s154 = sand.u32 %s46, 1
        %s155 = sand.u32 %s46, 1
        %s156 = smul.addr %s155, 32
        %s157 = scalar_lea.vmem [#allocation3], %s156
        %v158 = vld [vmem:[%s142] sm:$0xff]
        %vm159 = vcmp.gt.f32.partialorder %v158, 0.6
        %vm160 = vcmp.gt.f32.partialorder %v158, 1.0
        %vm161 = vcmp.gt.f32.partialorder %v158, 1.5
        %v162 = vsel %vm159, 1, 0
        %v163 = vcvt.s32.f32 %v162
        %v164 = vsel %vm160, 1, 0
        %v165 = vcvt.s32.f32 %v164
        %v166 = vadd.f32 %v163, %v165
        %v167 = vsel %vm161, 1, 0
        %v168 = vcvt.s32.f32 %v167
        %v169 = vadd.f32 %v166, %v168
        %170 = vst [vmem:[%s157] sm:$0xff] %v169
        %s171 = scalar_lea.vmem %s142, 8 [#allocation2]
        %v172 = vld [vmem:[%s171] sm:$0xff]
        %v173 = vmul.f32 %v158, 0.25
        %v174 = vadd.f32 %v173, %v172
        %v175 = vsel %vm159, %v172, %v174
        %v176 = vsel %vm160, %v172, %v174
        %v177 = vsel %vm161, %v172, %v174
        %vm178 = vcmp.gt.f32.partialorder %v175, 0.6
        %vm179 = vcmp.gt.f32.partialorder %v176, 1.0
        %vm180 = vcmp.gt.f32.partialorder %v177, 1.5
        %v181 = vsel %vm178, 1, 0
        %v182 = vcvt.s32.f32 %v181
        %v183 = vsel %vm179, 1, 0
        %v184 = vcvt.s32.f32 %v183
        %v185 = vadd.f32 %v182, %v184
        %v186 = vsel %vm180, 1, 0
        %v187 = vcvt.s32.f32 %v186
        %v188 = vadd.f32 %v185, %v187
        %s189 = scalar_lea.vmem %s157, 8 [#allocation3]
        %190 = vst [vmem:[%s189] sm:$0xff] %v188
        %s191 = scalar_lea.vmem %s142, 16 [#allocation2]
        %v192 = vld [vmem:[%s191] sm:$0xff]
        %v193 = vmul.f32 %v175, 0.25
        %v194 = vadd.f32 %v193, %v192
        %v195 = vsel %vm178, %v192, %v194
        %v196 = vmul.f32 %v176, 0.25
        %v197 = vadd.f32 %v196, %v192
        %v198 = vsel %vm179, %v192, %v197
        %v199 = vmul.f32 %v177, 0.25
        %v200 = vadd.f32 %v199, %v192
        %v201 = vsel %vm180, %v192, %v200
        %vm202 = vcmp.gt.f32.partialorder %v195, 0.6
        %vm203 = vcmp.gt.f32.partialorder %v198, 1.0
        %vm204 = vcmp.gt.f32.partialorder %v201, 1.5
        %v205 = vsel %vm202, 1, 0
        %v206 = vcvt.s32.f32 %v205
        %v207 = vsel %vm203, 1, 0
        %v208 = vcvt.s32.f32 %v207
        %v209 = vadd.f32 %v206, %v208
        %v210 = vsel %vm204, 1, 0
        %v211 = vcvt.s32.f32 %v210
        %v212 = vadd.f32 %v209, %v211
        %s213 = scalar_lea.vmem %s157, 16 [#allocation3]
        %214 = vst [vmem:[%s213] sm:$0xff] %v212
        %s215 = scalar_lea.vmem %s142, 24 [#allocation2]
        %v216 = vld [vmem:[%s215] sm:$0xff]
        %v217 = vmul.f32 %v195, 0.25
        %v218 = vadd.f32 %v217, %v216
        %v219 = vsel %vm202, %v216, %v218
        %v220 = vmul.f32 %v198, 0.25
        %v221 = vadd.f32 %v220, %v216
        %v222 = vsel %vm203, %v216, %v221
        %v223 = vmul.f32 %v201, 0.25
        %v224 = vadd.f32 %v223, %v216
        %v225 = vsel %vm204, %v216, %v224
        %vm226 = vcmp.gt.f32.partialorder %v219, 0.6
        %vm227 = vcmp.gt.f32.partialorder %v222, 1.0
        %vm228 = vcmp.gt.f32.partialorder %v225, 1.5
        %v229 = vsel %vm226, 1, 0
        %v230 = vcvt.s32.f32 %v229
        %v231 = vsel %vm227, 1, 0
        %v232 = vcvt.s32.f32 %v231
        %v233 = vadd.f32 %v230, %v232
        %v234 = vsel %vm228, 1, 0
        %v235 = vcvt.s32.f32 %v234
        %v236 = vadd.f32 %v233, %v235
        %s237 = scalar_lea.vmem %s157, 24 [#allocation3]
        %238 = vst [vmem:[%s237] sm:$0xff] %v236
        %s239 = sand.u32 %s46, 1
        %s240 = sand.u32 %s46, 1
        %s241 = smul.addr %s240, 32
        %s242 = scalar_lea.vmem [#allocation3], %s241
        // Predicated region
        $region63: #{mlf_forward.1} parent=57 // pred_check
          %p243 = pneg %p56
        $region64: #{mlf_forward.1} parent=57 // pred_check_branch
          %245 = sbr.rel (%p243) target = $region66
        $region65: #{mlf_forward.1} parent=57 // pred_region
          %s246 = smul.addr %s12, 8
          %s247 = scalar_lea.vmem %s1, %s246
          // Predicated region
          $region67: #{mlf_forward.1} parent=65 // pred_check
            _
          $region68: #{mlf_forward.1} parent=65 // pred_check_branch
            %249 = sbr.rel (0) target = $region70
          $region69: #{mlf_forward.1} parent=65 // pred_region
            // Predicated region
            $region71: #{mlf_forward.1} parent=69 // pred_check
              _
            $region72: #{mlf_forward.1} parent=69 // pred_check_branch
              %251 = sbr.rel (0) target = $region74
            $region73: #{mlf_forward.1} parent=69 // pred_region
              // Predicated region
              $region86: #{mlf_forward.1} parent=73 // pred_check
                _
              $region87: #{mlf_forward.1} parent=73 // pred_check_branch
                %273 = sbr.rel (0) target = $region89
              $region88: #{mlf_forward.1} parent=73 // pred_region
                loop: start=0, step=1, limit=1
                $region90: #{mlf_forward.1} parent=88 // loop_pre_header
                  _
                $region91: #{mlf_forward.1} parent=88 // loop_header
                  %s275 = sphi 0, %s279
                  %p276 = scmp.ge.s32.totalorder %s275, 1
                  %s280 = sphi %s242, %s242
                  %s281 = sphi %s247, %s247
                $region92: #{mlf_forward.1} parent=88 // loop_header_branch
                  %278 = sbr.rel (%p276) target = $region96
                $region93: #{mlf_forward.1} parent=88 // loop_body
                  %v282 = vld [vmem:[%s280] sm:$0xff]
                  %283 = vst [vmem:[%s281] sm:$0xff] %v282
                  %v284 = vld [vmem:[%s280 + $0x8] sm:$0xff]
                  %285 = vst [vmem:[%s281 + $0x10] sm:$0xff] %v284
                  %v286 = vld [vmem:[%s280 + $0x10] sm:$0xff]
                  %287 = vst [vmem:[%s281 + $0x20] sm:$0xff] %v286
                  %v288 = vld [vmem:[%s280 + $0x18] sm:$0xff]
                  %289 = vst [vmem:[%s281 + $0x30] sm:$0xff] %v288
                $region94: #{mlf_forward.1} parent=88 // loop_footer
                  %s279 = sadd.s32 1, %s275
                $region95: #{mlf_forward.1} parent=88 // loop_footer_branch
                  %274 = sbr.rel target = $region91
                $region96: #{mlf_forward.1} parent=88 // loop_exit
                  _
              $region89: #{mlf_forward.1} parent=73 // pred_fallthru
                _
              // Predicated region
              $region97: #{mlf_forward.1} parent=73 // pred_check
                _
              $region98: #{mlf_forward.1} parent=73 // pred_check_branch
                %291 = sbr.rel target = $region100
              $region99: #{mlf_forward.1} parent=73 // pred_region
                _
              $region100: #{mlf_forward.1} parent=73 // pred_fallthru
                _
            $region74: #{mlf_forward.1} parent=69 // pred_fallthru
              _
            // Predicated region
            $region75: #{mlf_forward.1} parent=69 // pred_check
              _
            $region76: #{mlf_forward.1} parent=69 // pred_check_branch
              %253 = sbr.rel target = $region78
            $region77: #{mlf_forward.1} parent=69 // pred_region
              %s255 = ssub.s32 256, 1
              loop: start=0, step=1, limit=1
              $region79: #{mlf_forward.1} parent=77 // loop_pre_header
                _
              $region80: #{mlf_forward.1} parent=77 // loop_header
                %s257 = sphi 0, %s261
                %p258 = scmp.ge.s32.totalorder %s257, 1
                %s262 = sphi %s242, %s242
                %s263 = sphi %s247, %s247
              $region81: #{mlf_forward.1} parent=77 // loop_header_branch
                %260 = sbr.rel (%p258) target = $region85
              $region82: #{mlf_forward.1} parent=77 // loop_body
                %v264 = vld [vmem:[%s262] sm:%s255]
                %265 = vst [vmem:[%s263] sm:%s255] %v264
                %v266 = vld [vmem:[%s262 + $0x8] sm:%s255]
                %267 = vst [vmem:[%s263 + $0x10] sm:%s255] %v266
                %v268 = vld [vmem:[%s262 + $0x10] sm:%s255]
                %269 = vst [vmem:[%s263 + $0x20] sm:%s255] %v268
                %v270 = vld [vmem:[%s262 + $0x18] sm:%s255]
                %271 = vst [vmem:[%s263 + $0x30] sm:%s255] %v270
              $region83: #{mlf_forward.1} parent=77 // loop_footer
                %s261 = sadd.s32 1, %s257
              $region84: #{mlf_forward.1} parent=77 // loop_footer_branch
                %256 = sbr.rel target = $region80
              $region85: #{mlf_forward.1} parent=77 // loop_exit
                _
            $region78: #{mlf_forward.1} parent=69 // pred_fallthru
              _
          $region70: #{mlf_forward.1} parent=65 // pred_fallthru
            _
          %292 = vnop
        $region66: #{mlf_forward.1} parent=57 // pred_fallthru
          _
      $region58: #{mlf_forward.1} parent=5 // pred_fallthru
        _
      %p293 = scmp.le.s32.totalorder 2, %s7
      // Predicated region
      $region101: #{mlf_forward.1} parent=5 // pred_check
        %p294 = pneg %p293
      $region102: #{mlf_forward.1} parent=5 // pred_check_branch
        %296 = sbr.rel (%p294) target = $region104
      $region103: #{mlf_forward.1} parent=5 // pred_region
        %s297 = ssub.s32 %s7, 2
        // Predicated region
        $region105: #{mlf_forward.1} parent=103 // pred_check
          %p298 = pneg %p62
        $region106: #{mlf_forward.1} parent=103 // pred_check_branch
          %300 = sbr.rel (%p298) target = $region108
        $region107: #{mlf_forward.1} parent=103 // pred_region
          %s301 = sand.u32 %s47, 1
          %s302 = sand.u32 %s47, 1
          %s303 = smul.addr %s302, 32
          %s304 = scalar_lea.vmem [#allocation3], %s303
        $region108: #{mlf_forward.1} parent=103 // pred_fallthru
          _
      $region104: #{mlf_forward.1} parent=5 // pred_fallthru
        _
    $region6: #{mlf_forward.1} parent=1 // loop_footer
      %s11 = sadd.s32 1, %s7
    $region7: #{mlf_forward.1} parent=1 // loop_footer_branch
      %6 = sbr.rel target = $region3
    $region8: #{mlf_forward.1} parent=1 // loop_exit
      _

</llo_original>
